<compile_context>
chip_gen: v7x
topology: tpu7x:2x2x1
jax: 0.10.0
libtpu: 0.0.40
codegen_flags: <defaults>
</compile_context>

<pallas_src>
import math

import jax
import jax.numpy as jnp
from jax.experimental import pallas as pl
from jax.experimental.pallas import tpu as pltpu


def ff_kernel(x_ref, w1v_ref, w1g_ref, b1v_ref, b1g_ref, w2_ref, b2_ref, o_ref):
    """Fused RMSNorm + Linear + GEGLU + Linear on one channel-first (D, tm) token tile."""
    x = x_ref[...].astype(jnp.float32)                         # (D, tm)

    # --- RMSNorm: F.normalize(x, dim=channel) * sqrt(D) * gamma ---
    # 1 / max(||x||, 1e-12) == rsqrt(max(sum(x^2), 1e-24)); gamma*sqrt(D) folded into W1.
    ssq = jnp.sum(x * x, axis=0, keepdims=True)                # (1, tm)
    inv = jax.lax.rsqrt(jnp.maximum(ssq, 1e-24))
    xn = (x * inv).astype(jnp.bfloat16)                        # bf16 MXU operand

    # --- Linear(dim, 2*inner), pre-split into val / gate halves (gamma folded in) ---
    val = jnp.dot(w1v_ref[...], xn, preferred_element_type=jnp.float32) + b1v_ref[...]
    gate = jnp.dot(w1g_ref[...], xn, preferred_element_type=jnp.float32) + b1g_ref[...]

    # --- GEGLU: gelu(gate) * val  (exact erf, matches torch F.gelu default) ---
    gelu_gate = 0.5 * gate * (1.0 + jax.lax.erf(gate * (1.0 / math.sqrt(2.0))))
    a = (gelu_gate * val).astype(jnp.bfloat16)                 # (inner, tm) bf16 operand

    # --- Linear(inner, dim) ---
    out = jnp.dot(w2_ref[...], a, preferred_element_type=jnp.float32) + b2_ref[...]
    o_ref[...] = out.astype(o_ref.dtype)                       # (D, tm) lane-dense store


def feed_forward(x, gamma, w1, b1, w2, b2, *, tm=1024):
    """x: (B, N, D). gamma: (1, D). w1: (D, 2*inner). b1: (1, 2*inner).
    w2: (inner, D). b2: (1, D). Returns (B, N, D).
    Weights are (in_features, out_features), i.e. transposed vs torch Linear.weight."""
    B, N, D = x.shape
    M = B * N
    inner = w1.shape[1] // 2

    # Token tile lives on the lane axis -> keep it a multiple of 128 and pad M up.
    tm = max(128, (tm // 128) * 128)
    m128 = max(128, ((M + 127) // 128) * 128)
    tm = min(tm, m128)
    if m128 >= 256:
        # Keep grid_m >= 2 so v7x's two TensorCores both get work ("parallel" axis).
        tm = min(tm, ((m128 // 2 + 127) // 128) * 128)
    grid_m = pl.cdiv(m128, tm)
    m_pad = grid_m * tm

    f32, bf16 = jnp.float32, jnp.bfloat16

    # Channel-first (D, M) slab: token axis maps to lanes (dense vld/vst); D=48 sits on
    # sublanes (multiple of 8). Padded token columns are zero -> rsqrt stays finite and
    # the junk rows are sliced off below.
    x_t = x.reshape(M, D).astype(f32).T                        # (D, M)
    if m_pad != M:
        x_t = jnp.pad(x_t, ((0, 0), (0, m_pad - M)))

    # Fold gamma * sqrt(D) (per input channel) into both W1 halves, then cast to bf16.
    gcol = gamma.reshape(D, 1).astype(f32) * (D ** 0.5)        # (D, 1)
    w1f = w1.astype(f32) * gcol                                # (D, 2*inner)
    w1v_t = w1f[:, :inner].T.astype(bf16)                      # (inner, D)
    w1g_t = w1f[:, inner:].T.astype(bf16)                      # (inner, D)
    b1v = b1.reshape(-1)[:inner].reshape(inner, 1).astype(f32)
    b1g = b1.reshape(-1)[inner:].reshape(inner, 1).astype(f32)
    w2_t = w2.astype(bf16).T                                   # (D, inner)
    b2c = b2.reshape(D, 1).astype(f32)

    def const(shape):
        # Constant operands: same block every grid step (Pallas won't re-DMA it).
        return pl.BlockSpec(shape, lambda i: (0, 0))

    out = pl.pallas_call(
        ff_kernel,
        out_shape=jax.ShapeDtypeStruct((D, m_pad), x.dtype),
        grid_spec=pltpu.PrefetchScalarGridSpec(
            num_scalar_prefetch=0,
            grid=(grid_m,),
            in_specs=[
                pl.BlockSpec((D, tm), lambda i: (0, i)),       # x tile (channel-first)
                const((inner, D)),                             # W1^T val half (gamma folded, bf16)
                const((inner, D)),                             # W1^T gate half (bf16)
                const((inner, 1)),                             # b1 val half
                const((inner, 1)),                             # b1 gate half
                const((D, inner)),                             # W2^T (bf16)
                const((D, 1)),                                 # b2
            ],
            out_specs=pl.BlockSpec((D, tm), lambda i: (0, i)),
        ),
        compiler_params=pltpu.CompilerParams(
            dimension_semantics=("parallel",)),
    )(x_t, w1v_t, w1g_t, b1v, b1g, w2_t, b2c)

    return out[:, :M].T.reshape(B, N, D)


def reference_feed_forward(x, gamma, w1, b1, w2, b2):
    """Plain-JAX f32 reference matching the PyTorch forward (time_cond=None)."""
    D = x.shape[-1]
    norm = jnp.maximum(jnp.sqrt(jnp.sum(x * x, axis=-1, keepdims=True)), 1e-12)
    xn = (x / norm) * (D ** 0.5) * gamma[0]
    h = xn @ w1 + b1[0]
    inner = h.shape[-1] // 2
    val, gate = h[..., :inner], h[..., inner:]
    a = 0.5 * gate * (1.0 + jax.lax.erf(gate / math.sqrt(2.0))) * val
    return a @ w2 + b2[0]


if __name__ == "__main__":
    # Small shapes consistent with the module: dim=48, mult=4 -> inner_dim = int(48*4*2/3) = 128
    B, N, dim, mult = 2, 8, 48, 4
    inner_dim = int(dim * mult * 2 / 3)        # 128

    key = jax.random.PRNGKey(0)
    kx, k1, k2, k3, k4 = jax.random.split(key, 5)

    x = jax.random.normal(kx, (B, N, dim), dtype=jnp.float32)

    # Deterministic synthetic parameters (shapes from __init__).
    # NOTE: the module zero-inits the last Linear; nonzero deterministic values are used
    # here so the kernel's hot path is actually exercised.
    gamma = jnp.ones((1, dim), dtype=jnp.float32)                               # RMSNorm gamma
    w1 = jax.random.normal(k1, (dim, inner_dim * 2), dtype=jnp.float32) * 0.05  # Linear(dim, inner*2)
    b1 = jax.random.normal(k2, (1, inner_dim * 2), dtype=jnp.float32) * 0.01
    w2 = jax.random.normal(k3, (inner_dim, dim), dtype=jnp.float32) * 0.05      # Linear(inner, dim)
    b2 = jax.random.normal(k4, (1, dim), dtype=jnp.float32) * 0.01

    out = feed_forward(x, gamma, w1, b1, w2, b2)
    out = jax.block_until_ready(out)

    ref = reference_feed_forward(x, gamma, w1, b1, w2, b2)
    assert out.shape == (B, N, dim)
    max_err = float(jnp.max(jnp.abs(out - ref)))
    # bf16 matmul operands (f32 accumulation) -> bf16-level tolerance vs the f32 reference.
    assert jnp.allclose(out, ref, atol=2e-2, rtol=2e-2), f"mismatch vs JAX reference (max abs err {max_err})"

    print("KERNEL_OK")
</pallas_src>

<mosaic_0001>
module attributes {stable_mosaic.version = 11 : i64} {
  func.func @ff_kernel(%arg0: i32, %arg1: memref<48x128xf32, #tpu.memory_space<vmem>>, %arg2: memref<128x48xbf16, #tpu.memory_space<vmem>>, %arg3: memref<128x48xbf16, #tpu.memory_space<vmem>>, %arg4: memref<128x1xf32, #tpu.memory_space<vmem>>, %arg5: memref<128x1xf32, #tpu.memory_space<vmem>>, %arg6: memref<48x128xbf16, #tpu.memory_space<vmem>>, %arg7: memref<48x1xf32, #tpu.memory_space<vmem>>, %arg8: memref<48x128xf32, #tpu.memory_space<vmem>>) attributes {dimension_semantics = [#tpu.dimension_semantics<parallel>], iteration_bounds = array<i64: 1>, scalar_prefetch = 0 : i64, scratch_operands = 0 : i64, tpu.core_type = #tpu.core_type<tc>, window_params = [{transform_indices = @transform_0, window_bounds = array<i64: 48, 128>}, {pipeline_mode = #tpu.pipeline_mode<synchronous>, transform_indices = @transform_1, window_bounds = array<i64: 128, 48>}, {pipeline_mode = #tpu.pipeline_mode<synchronous>, transform_indices = @transform_2, window_bounds = array<i64: 128, 48>}, {pipeline_mode = #tpu.pipeline_mode<synchronous>, transform_indices = @transform_3, window_bounds = array<i64: 128, 1>}, {pipeline_mode = #tpu.pipeline_mode<synchronous>, transform_indices = @transform_4, window_bounds = array<i64: 128, 1>}, {pipeline_mode = #tpu.pipeline_mode<synchronous>, transform_indices = @transform_5, window_bounds = array<i64: 48, 128>}, {pipeline_mode = #tpu.pipeline_mode<synchronous>, transform_indices = @transform_6, window_bounds = array<i64: 48, 1>}, {transform_indices = @transform_7, window_bounds = array<i64: 48, 128>}]} {
    %c0 = arith.constant 0 : index
    %c0_0 = arith.constant 0 : index
    %0 = vector.load %arg1[%c0, %c0_0] : memref<48x128xf32, #tpu.memory_space<vmem>>, vector<48x128xf32>
    %1 = arith.mulf %0, %0 : vector<48x128xf32>
    %cst = arith.constant dense<0.000000e+00> : vector<128xf32>
    %2 = vector.multi_reduction <add>, %1, %cst [0] : vector<48x128xf32> to vector<128xf32>
    %3 = vector.shape_cast %2 : vector<128xf32> to vector<1x128xf32>
    %cst_1 = arith.constant 1.000000e-24 : f32
    %4 = vector.broadcast %cst_1 : f32 to vector<1x128xf32>
    %5 = arith.maximumf %3, %4 : vector<1x128xf32>
    %6 = math.rsqrt %5 : vector<1x128xf32>
    %7 = vector.broadcast %6 : vector<1x128xf32> to vector<48x128xf32>
    %8 = arith.mulf %0, %7 : vector<48x128xf32>
    %9 = arith.truncf %8 : vector<48x128xf32> to vector<48x128xbf16>
    %c0_2 = arith.constant 0 : index
    %c0_3 = arith.constant 0 : index
    %10 = vector.load %arg2[%c0_2, %c0_3] : memref<128x48xbf16, #tpu.memory_space<vmem>>, vector<128x48xbf16>
    %cst_4 = arith.constant dense<0.000000e+00> : vector<128x128xf32>
    %11 = tpu.matmul %10, %9, %cst_4 {dimension_numbers = #tpu.dot_dimension_numbers<[1], [0], [0], [1], [0, 0, 1, 1], [], []>} : vector<128x48xbf16>, vector<48x128xbf16>, vector<128x128xf32> -> vector<128x128xf32>
    %c0_5 = arith.constant 0 : index
    %c0_6 = arith.constant 0 : index
    %12 = vector.load %arg4[%c0_5, %c0_6] : memref<128x1xf32, #tpu.memory_space<vmem>>, vector<128x1xf32>
    %13 = vector.broadcast %12 : vector<128x1xf32> to vector<128x128xf32>
    %14 = arith.addf %11, %13 : vector<128x128xf32>
    %c0_7 = arith.constant 0 : index
    %c0_8 = arith.constant 0 : index
    %15 = vector.load %arg3[%c0_7, %c0_8] : memref<128x48xbf16, #tpu.memory_space<vmem>>, vector<128x48xbf16>
    %cst_9 = arith.constant dense<0.000000e+00> : vector<128x128xf32>
    %16 = tpu.matmul %15, %9, %cst_9 {dimension_numbers = #tpu.dot_dimension_numbers<[1], [0], [0], [1], [0, 0, 1, 1], [], []>} : vector<128x48xbf16>, vector<48x128xbf16>, vector<128x128xf32> -> vector<128x128xf32>
    %c0_10 = arith.constant 0 : index
    %c0_11 = arith.constant 0 : index
    %17 = vector.load %arg5[%c0_10, %c0_11] : memref<128x1xf32, #tpu.memory_space<vmem>>, vector<128x1xf32>
    %18 = vector.broadcast %17 : vector<128x1xf32> to vector<128x128xf32>
    %19 = arith.addf %16, %18 : vector<128x128xf32>
    %cst_12 = arith.constant 5.000000e-01 : f32
    %20 = vector.broadcast %cst_12 : f32 to vector<128x128xf32>
    %21 = arith.mulf %20, %19 : vector<128x128xf32>
    %cst_13 = arith.constant 0.707106769 : f32
    %22 = vector.broadcast %cst_13 : f32 to vector<128x128xf32>
    %23 = arith.mulf %19, %22 : vector<128x128xf32>
    %24 = math.erf %23 : vector<128x128xf32>
    %cst_14 = arith.constant 1.000000e+00 : f32
    %25 = vector.broadcast %cst_14 : f32 to vector<128x128xf32>
    %26 = arith.addf %25, %24 : vector<128x128xf32>
    %27 = arith.mulf %21, %26 : vector<128x128xf32>
    %28 = arith.mulf %27, %14 : vector<128x128xf32>
    %29 = arith.truncf %28 : vector<128x128xf32> to vector<128x128xbf16>
    %c0_15 = arith.constant 0 : index
    %c0_16 = arith.constant 0 : index
    %30 = vector.load %arg6[%c0_15, %c0_16] : memref<48x128xbf16, #tpu.memory_space<vmem>>, vector<48x128xbf16>
    %cst_17 = arith.constant dense<0.000000e+00> : vector<48x128xf32>
    %31 = tpu.matmul %30, %29, %cst_17 {dimension_numbers = #tpu.dot_dimension_numbers<[1], [0], [0], [1], [0, 0, 1, 1], [], []>} : vector<48x128xbf16>, vector<128x128xbf16>, vector<48x128xf32> -> vector<48x128xf32>
    %c0_18 = arith.constant 0 : index
    %c0_19 = arith.constant 0 : index
    %32 = vector.load %arg7[%c0_18, %c0_19] : memref<48x1xf32, #tpu.memory_space<vmem>>, vector<48x1xf32>
    %33 = vector.broadcast %32 : vector<48x1xf32> to vector<48x128xf32>
    %34 = arith.addf %31, %33 : vector<48x128xf32>
    %c0_20 = arith.constant 0 : index
    %c0_21 = arith.constant 0 : index
    %35 = vector.load %arg8[%c0_20, %c0_21] : memref<48x128xf32, #tpu.memory_space<vmem>>, vector<48x128xf32>
    tpu.vector_store %arg8[%c0_20, %c0_21], %34 {strides = array<i32>} : memref<48x128xf32, #tpu.memory_space<vmem>>, vector<48x128xf32>,
    return
  }
  func.func @transform_0(%arg0: i32) -> (i32, i32) {
    %c0_i32 = arith.constant 0 : i32
    %c0_i32_0 = arith.constant 0 : i32
    return %c0_i32, %arg0 : i32, i32
  }
  func.func @transform_1(%arg0: i32) -> (i32, i32) {
    %c0_i32 = arith.constant 0 : i32
    %c0_i32_0 = arith.constant 0 : i32
    %c0_i32_1 = arith.constant 0 : i32
    return %c0_i32, %c0_i32_0 : i32, i32
  }
  func.func @transform_2(%arg0: i32) -> (i32, i32) {
    %c0_i32 = arith.constant 0 : i32
    %c0_i32_0 = arith.constant 0 : i32
    %c0_i32_1 = arith.constant 0 : i32
    return %c0_i32, %c0_i32_0 : i32, i32
  }
  func.func @transform_3(%arg0: i32) -> (i32, i32) {
    %c0_i32 = arith.constant 0 : i32
    %c0_i32_0 = arith.constant 0 : i32
    %c0_i32_1 = arith.constant 0 : i32
    return %c0_i32, %c0_i32_0 : i32, i32
  }
  func.func @transform_4(%arg0: i32) -> (i32, i32) {
    %c0_i32 = arith.constant 0 : i32
    %c0_i32_0 = arith.constant 0 : i32
    %c0_i32_1 = arith.constant 0 : i32
    return %c0_i32, %c0_i32_0 : i32, i32
  }
  func.func @transform_5(%arg0: i32) -> (i32, i32) {
    %c0_i32 = arith.constant 0 : i32
    %c0_i32_0 = arith.constant 0 : i32
    %c0_i32_1 = arith.constant 0 : i32
    return %c0_i32, %c0_i32_0 : i32, i32
  }
  func.func @transform_6(%arg0: i32) -> (i32, i32) {
    %c0_i32 = arith.constant 0 : i32
    %c0_i32_0 = arith.constant 0 : i32
    %c0_i32_1 = arith.constant 0 : i32
    return %c0_i32, %c0_i32_0 : i32, i32
  }
  func.func @transform_7(%arg0: i32) -> (i32, i32) {
    %c0_i32 = arith.constant 0 : i32
    %c0_i32_0 = arith.constant 0 : i32
    return %c0_i32, %arg0 : i32, i32
  }
}

</mosaic_0001>

<llo_original>
// kernel: tpu_custom_call.1
$region0: #{tpu_custom_call.1}
  #allocation0 [shape = 'u32[]', space=smem, size = 0x4, offset = 0x4, fixed_abs, tag = 'smem constant byte address 0x4 - core index']
  #allocation1 [shape = 'u32[144,128]{1,0:T(1,128)}', space=vmem, size = 0x12000, scoped, tag = 'internal scratch']
  %s0 = inlined_call_operand.vmem [shape: f32[48,128], index: 0, kind: input, shape index: {}]
  %s1 = inlined_call_operand.vmem [shape: bf16[128,48], index: 1, kind: input, shape index: {}]
  %s2 = inlined_call_operand.vmem [shape: bf16[128,48], index: 2, kind: input, shape index: {}]
  %s3 = inlined_call_operand.vmem [shape: f32[128,1], index: 3, kind: input, shape index: {}]
  %s4 = inlined_call_operand.vmem [shape: f32[128,1], index: 4, kind: input, shape index: {}]
  %s5 = inlined_call_operand.vmem [shape: bf16[48,128], index: 5, kind: input, shape index: {}]
  %s6 = inlined_call_operand.vmem [shape: f32[48,1], index: 6, kind: input, shape index: {}]
  %s7 = inlined_call_operand.hbm [shape: f32[48,128], index: 7, kind: output, shape index: {}]
  %s8 = sld [smem:[#allocation0]]
  $region38: #{tpu_custom_call.1} parent=0
    _
  %s10 = ssub.s32 1, %s8
  %s11 = scalar_select 0, %s10, %s8
  $region1: #{tpu_custom_call.1} parent=0
    #allocation2 [shape = 'u8[24576]{0}', space=vmem, size = 0x6000, scoped, tag = 'output window, operand 0, single buffered']
    #allocation3 [shape = 's32[1]{0}', space=sflag, size = 0x4, scoped, tag = 'scoped memory for tpu_custom_call.1']
    %12 = vsyncpa [#allocation3], 0
    // Predicated region
    $region2: #{tpu_custom_call.1} parent=1 // pred_check
      _
    $region3: #{tpu_custom_call.1} parent=1 // pred_check_branch
      %14 = sbr.rel (0) target = $region5
    $region4: #{tpu_custom_call.1} parent=1 // pred_region
      _
    $region5: #{tpu_custom_call.1} parent=1 // pred_fallthru
      _
    // Predicated region
    $region6: #{tpu_custom_call.1} parent=1 // pred_check
      _
    $region7: #{tpu_custom_call.1} parent=1 // pred_check_branch
      %16 = sbr.rel (0) target = $region9
    $region8: #{tpu_custom_call.1} parent=1 // pred_region
      _
    $region9: #{tpu_custom_call.1} parent=1 // pred_fallthru
      _
    // Predicated region
    $region10: #{tpu_custom_call.1} parent=1 // pred_check
      _
    $region11: #{tpu_custom_call.1} parent=1 // pred_check_branch
      %18 = sbr.rel (0) target = $region13
    $region12: #{tpu_custom_call.1} parent=1 // pred_region
      _
    $region13: #{tpu_custom_call.1} parent=1 // pred_fallthru
      _
    // Predicated region
    $region14: #{tpu_custom_call.1} parent=1 // pred_check
      _
    $region15: #{tpu_custom_call.1} parent=1 // pred_check_branch
      %20 = sbr.rel (0) target = $region17
    $region16: #{tpu_custom_call.1} parent=1 // pred_region
      _
    $region17: #{tpu_custom_call.1} parent=1 // pred_fallthru
      _
    // Predicated region
    $region18: #{tpu_custom_call.1} parent=1 // pred_check
      _
    $region19: #{tpu_custom_call.1} parent=1 // pred_check_branch
      %22 = sbr.rel (0) target = $region21
    $region20: #{tpu_custom_call.1} parent=1 // pred_region
      _
    $region21: #{tpu_custom_call.1} parent=1 // pred_fallthru
      _
    // Predicated region
    $region22: #{tpu_custom_call.1} parent=1 // pred_check
      _
    $region23: #{tpu_custom_call.1} parent=1 // pred_check_branch
      %24 = sbr.rel (0) target = $region25
    $region24: #{tpu_custom_call.1} parent=1 // pred_region
      _
    $region25: #{tpu_custom_call.1} parent=1 // pred_fallthru
      _
    // Predicated region
    $region26: #{tpu_custom_call.1} parent=1 // pred_check
      _
    $region27: #{tpu_custom_call.1} parent=1 // pred_check_branch
      %26 = sbr.rel (0) target = $region29
    $region28: #{tpu_custom_call.1} parent=1 // pred_region
      _
    $region29: #{tpu_custom_call.1} parent=1 // pred_fallthru
      _
    %v28 = vld [vmem:[%s0] sm:$0xff]
    %v29 = vld [vmem:[%s0 + $0x8] sm:$0xff]
    %v30 = vld [vmem:[%s0 + $0x10] sm:$0xff]
    %v31 = vld [vmem:[%s0 + $0x18] sm:$0xff]
    %v32 = vld [vmem:[%s0 + $0x20] sm:$0xff]
    %v33 = vld [vmem:[%s0 + $0x28] sm:$0xff]
    %v34 = vmul.f32 %v28, %v28
    %v35 = vmul.f32 %v29, %v29
    %v36 = vmul.f32 %v30, %v30
    %v37 = vmul.f32 %v31, %v31
    %v38 = vmul.f32 %v32, %v32
    %v39 = vmul.f32 %v33, %v33
    %v40 = vadd.f32 %v34, %v35
    %v41 = vadd.f32 %v40, %v36
    %v42 = vadd.f32 %v41, %v37
    %v43 = vadd.f32 %v42, %v38
    %v44 = vadd.f32 %v43, %v39
    %v45 = vrot.slane %v44, 4
    %v46 = vadd.f32 %v44, %v45
    %v47 = vrot.slane %v46, 2
    %v48 = vadd.f32 %v46, %v47
    %v49 = vrot.slane %v48, 1
    %v50 = vadd.f32 %v48, %v49
    %v51 = vmax.f32 %v50, 1e-24
    %v52 = vrsqrt.pop %v51
    %v53 = vmul.f32 %v28, %v52
    %v54 = vmul.f32 %v29, %v52
    %v55 = vmul.f32 %v30, %v52
    %v56 = vmul.f32 %v31, %v52
    %v57 = vmul.f32 %v32, %v52
    %v58 = vmul.f32 %v33, %v52
    %v59 = vpack.c.bf16 %v54, %v53
    %v60 = vpack.c.bf16 %v56, %v55
    %v61 = vpack.c.bf16 %v58, %v57
    %v62 = vld [vmem:[%s1] sm:$0xf]
    %v63 = vld [vmem:[%s1 + $0x4] sm:$0xf]
    %v64 = vld [vmem:[%s1 + $0x8] sm:$0xf]
    %v65 = vld [vmem:[%s1 + $0xc] sm:$0xf]
    %v66 = vld [vmem:[%s1 + $0x10] sm:$0xf]
    %v67 = vld [vmem:[%s1 + $0x14] sm:$0xf]
    %v68 = vld [vmem:[%s1 + $0x18] sm:$0xf]
    %v69 = vld [vmem:[%s1 + $0x1c] sm:$0xf]
    %v70 = vld [vmem:[%s1 + $0x20] sm:$0xf]
    %v71 = vld [vmem:[%s1 + $0x24] sm:$0xf]
    %v72 = vld [vmem:[%s1 + $0x28] sm:$0xf]
    %v73 = vld [vmem:[%s1 + $0x2c] sm:$0xf]
    %v74 = vld [vmem:[%s1 + $0x30] sm:$0xf]
    %v75 = vld [vmem:[%s1 + $0x34] sm:$0xf]
    %v76 = vld [vmem:[%s1 + $0x38] sm:$0xf]
    %v77 = vld [vmem:[%s1 + $0x3c] sm:$0xf]
    %v78 = vld [vmem:[%s3] sm:$0xff]
    %v79 = vld [vmem:[%s3 + $0x8] sm:$0xff]
    %v80 = vld [vmem:[%s3 + $0x10] sm:$0xff]
    %v81 = vld [vmem:[%s3 + $0x18] sm:$0xff]
    %v82 = vld [vmem:[%s3 + $0x20] sm:$0xff]
    %v83 = vld [vmem:[%s3 + $0x28] sm:$0xff]
    %v84 = vld [vmem:[%s3 + $0x30] sm:$0xff]
    %v85 = vld [vmem:[%s3 + $0x38] sm:$0xff]
    %v86 = vld [vmem:[%s3 + $0x40] sm:$0xff]
    %v87 = vld [vmem:[%s3 + $0x48] sm:$0xff]
    %v88 = vld [vmem:[%s3 + $0x50] sm:$0xff]
    %v89 = vld [vmem:[%s3 + $0x58] sm:$0xff]
    %v90 = vld [vmem:[%s3 + $0x60] sm:$0xff]
    %v91 = vld [vmem:[%s3 + $0x68] sm:$0xff]
    %v92 = vld [vmem:[%s3 + $0x70] sm:$0xff]
    %v93 = vld [vmem:[%s3 + $0x78] sm:$0xff]
    %95 = vset.pattern.permute.xlu0 0
    %96 = vperm.xlu0 %95, %v78
    %v97 = vpop.permute.xlu0 %96
    %100 = vset.pattern.permute.xlu0 0
    %101 = vperm.xlu0 %100, %v79
    %v102 = vpop.permute.xlu0 %101
    %105 = vset.pattern.permute.xlu0 0
    %106 = vperm.xlu0 %105, %v80
    %v107 = vpop.permute.xlu0 %106
    %110 = vset.pattern.permute.xlu0 0
    %111 = vperm.xlu0 %110, %v81
    %v112 = vpop.permute.xlu0 %111
    %115 = vset.pattern.permute.xlu0 0
    %116 = vperm.xlu0 %115, %v82
    %v117 = vpop.permute.xlu0 %116
    %120 = vset.pattern.permute.xlu0 0
    %121 = vperm.xlu0 %120, %v83
    %v122 = vpop.permute.xlu0 %121
    %125 = vset.pattern.permute.xlu0 0
    %126 = vperm.xlu0 %125, %v84
    %v127 = vpop.permute.xlu0 %126
    %130 = vset.pattern.permute.xlu0 0
    %131 = vperm.xlu0 %130, %v85
    %v132 = vpop.permute.xlu0 %131
    %135 = vset.pattern.permute.xlu0 0
    %136 = vperm.xlu0 %135, %v86
    %v137 = vpop.permute.xlu0 %136
    %140 = vset.pattern.permute.xlu0 0
    %141 = vperm.xlu0 %140, %v87
    %v142 = vpop.permute.xlu0 %141
    %145 = vset.pattern.permute.xlu0 0
    %146 = vperm.xlu0 %145, %v88
    %v147 = vpop.permute.xlu0 %146
    %150 = vset.pattern.permute.xlu0 0
    %151 = vperm.xlu0 %150, %v89
    %v152 = vpop.permute.xlu0 %151
    %155 = vset.pattern.permute.xlu0 0
    %156 = vperm.xlu0 %155, %v90
    %v157 = vpop.permute.xlu0 %156
    %160 = vset.pattern.permute.xlu0 0
    %161 = vperm.xlu0 %160, %v91
    %v162 = vpop.permute.xlu0 %161
    %165 = vset.pattern.permute.xlu0 0
    %166 = vperm.xlu0 %165, %v92
    %v167 = vpop.permute.xlu0 %166
    %170 = vset.pattern.permute.xlu0 0
    %171 = vperm.xlu0 %170, %v93
    %v172 = vpop.permute.xlu0 %171
    %v190 = vunpack.c.l.b16 %v62
    %v191 = vunpack.c.l.b16 %v63
    %v192 = vunpack.c.l.b16 %v64
    %v193 = vunpack.c.l.b16 %v65
    %v194 = vunpack.c.l.b16 %v66
    %v195 = vunpack.c.l.b16 %v67
    %v196 = vunpack.c.l.b16 %v68
    %v197 = vunpack.c.l.b16 %v69
    %v198 = vunpack.c.l.b16 %v70
    %v199 = vunpack.c.l.b16 %v71
    %v200 = vunpack.c.l.b16 %v72
    %v201 = vunpack.c.l.b16 %v73
    %v202 = vunpack.c.l.b16 %v74
    %v203 = vunpack.c.l.b16 %v75
    %v204 = vunpack.c.l.b16 %v76
    %v205 = vunpack.c.l.b16 %v77
    %v206 = vpack.c.b16 %v191, %v190
    %v207 = vpack.c.b16 %v193, %v192
    %v208 = vpack.c.b16 %v195, %v194
    %v209 = vpack.c.b16 %v197, %v196
    %v210 = vpack.c.b16 %v199, %v198
    %v211 = vpack.c.b16 %v201, %v200
    %v212 = vpack.c.b16 %v203, %v202
    %v213 = vpack.c.b16 %v205, %v204
    %vm214 = vcmask 392192
    %v216 = vsel %vm214, %v206, 0
    %v219 = vsel %vm214, %v207, 0
    %v222 = vsel %vm214, %v208, 0
    %v225 = vsel %vm214, %v209, 0
    %v228 = vsel %vm214, %v210, 0
    %v231 = vsel %vm214, %v211, 0
    %v234 = vsel %vm214, %v212, 0
    %v237 = vsel %vm214, %v213, 0
    %239 = vmatprep.subr.bf16.mxu0 0
    %240 = vmatpush1.bf16.msra.mxu0 %v59
    %241 = vmatprep.subr.bf16.mxu0 0
    %242 = vmatpush1.bf16.msra.mxu0 %v60
    %243 = vmatprep.subr.bf16.mxu0 0
    %244 = vmatpush1.bf16.msra.mxu0 %v61
    %245 = vmatprep.subr.bf16.mxu0 0
    %246 = vmatpush1.bf16.msra.mxu0 0
    %247 = vmatprep.subr.bf16.mxu0 0
    %248 = vmatpush1.bf16.msra.mxu0 0
    %249 = vmatprep.subr.bf16.mxu0 0
    %250 = vmatpush1.bf16.msra.mxu0 0
    %251 = vmatprep.subr.bf16.mxu0 0
    %252 = vmatpush1.bf16.msra.mxu0 0
    %253 = vmatprep.subr.bf16.mxu0 0
    %254 = vmatpush1.bf16.msra.mxu0 0
    %255 = vmatprep.subr.bf16.mxu0 0
    %256 = vmatpush1.bf16.msra.mxu0 0
    %257 = vmatprep.subr.bf16.mxu0 0
    %258 = vmatpush1.bf16.msra.mxu0 0
    %259 = vmatprep.subr.bf16.mxu0 0
    %260 = vmatpush1.bf16.msra.mxu0 0
    %261 = vmatprep.subr.bf16.mxu0 0
    %262 = vmatpush1.bf16.msra.mxu0 0
    %263 = vmatprep.subr.bf16.mxu0 0
    %264 = vmatpush1.bf16.msra.mxu0 0
    %265 = vmatprep.subr.bf16.mxu0 0
    %266 = vmatpush1.bf16.msra.mxu0 0
    %267 = vmatprep.subr.bf16.mxu0 0
    %268 = vmatpush1.bf16.msra.mxu0 0
    %269 = vmatprep.subr.bf16.mxu0 0
    %270 = vmatpush1.bf16.msra.mxu0 0
    %271 = vmatprep.mubr.bf16.mxu0 0
    %272 = vmatmul.mubr.bf16.gmra.mrb[0].mxu0 %v216
    %v273 = vpop.f32.mrb[0].mxu0
    %v274 = vadd.f32 %v97, %v273
    %v275 = vpop.f32.mrb[0].mxu0
    %v276 = vpop.f32.mrb[0].mxu0
    %v277 = vadd.f32 %v102, %v276
    %v278 = vpop.f32.mrb[0].mxu0
    %279 = vmatprep.mubr.bf16.mxu0 0
    %280 = vmatmul.mubr.bf16.gmra.mrb[0].mxu0 %v219
    %v281 = vpop.f32.mrb[0].mxu0
    %v282 = vadd.f32 %v107, %v281
    %v283 = vpop.f32.mrb[0].mxu0
    %v284 = vpop.f32.mrb[0].mxu0
    %v285 = vadd.f32 %v112, %v284
    %v286 = vpop.f32.mrb[0].mxu0
    %287 = vmatprep.mubr.bf16.mxu0 0
    %288 = vmatmul.mubr.bf16.gmra.mrb[0].mxu0 %v222
    %v289 = vpop.f32.mrb[0].mxu0
    %v290 = vadd.f32 %v117, %v289
    %v291 = vpop.f32.mrb[0].mxu0
    %v292 = vpop.f32.mrb[0].mxu0
    %v293 = vadd.f32 %v122, %v292
    %v294 = vpop.f32.mrb[0].mxu0
    %295 = vmatprep.mubr.bf16.mxu0 0
    %296 = vmatmul.mubr.bf16.gmra.mrb[0].mxu0 %v225
    %v297 = vpop.f32.mrb[0].mxu0
    %v298 = vadd.f32 %v127, %v297
    %v299 = vpop.f32.mrb[0].mxu0
    %v300 = vpop.f32.mrb[0].mxu0
    %v301 = vadd.f32 %v132, %v300
    %v302 = vpop.f32.mrb[0].mxu0
    %303 = vmatprep.mubr.bf16.mxu0 0
    %304 = vmatmul.mubr.bf16.gmra.mrb[0].mxu0 %v228
    %v305 = vpop.f32.mrb[0].mxu0
    %v306 = vadd.f32 %v137, %v305
    %v307 = vpop.f32.mrb[0].mxu0
    %v308 = vpop.f32.mrb[0].mxu0
    %v309 = vadd.f32 %v142, %v308
    %v310 = vpop.f32.mrb[0].mxu0
    %311 = vmatprep.mubr.bf16.mxu0 0
    %312 = vmatmul.mubr.bf16.gmra.mrb[0].mxu0 %v231
    %v313 = vpop.f32.mrb[0].mxu0
    %v314 = vadd.f32 %v147, %v313
    %v315 = vpop.f32.mrb[0].mxu0
    %v316 = vpop.f32.mrb[0].mxu0
    %v317 = vadd.f32 %v152, %v316
    %v318 = vpop.f32.mrb[0].mxu0
    %319 = vmatprep.mubr.bf16.mxu0 0
    %320 = vmatmul.mubr.bf16.gmra.mrb[0].mxu0 %v234
    %v321 = vpop.f32.mrb[0].mxu0
    %v322 = vadd.f32 %v157, %v321
    %v323 = vpop.f32.mrb[0].mxu0
    %v324 = vpop.f32.mrb[0].mxu0
    %v325 = vadd.f32 %v162, %v324
    %v326 = vpop.f32.mrb[0].mxu0
    %327 = vmatprep.mubr.bf16.mxu0 0
    %328 = vmatmul.mubr.bf16.gmra.mrb[0].mxu0 %v237
    %v329 = vpop.f32.mrb[0].mxu0
    %v330 = vadd.f32 %v167, %v329
    %v331 = vpop.f32.mrb[0].mxu0
    %v332 = vpop.f32.mrb[0].mxu0
    %v333 = vadd.f32 %v172, %v332
    %v334 = vpop.f32.mrb[0].mxu0
    %335 = vdwg.mxu0
    %v336 = vld [vmem:[%s2] sm:$0xf]
    %v337 = vld [vmem:[%s2 + $0x4] sm:$0xf]
    %v338 = vld [vmem:[%s2 + $0x8] sm:$0xf]
    %v339 = vld [vmem:[%s2 + $0xc] sm:$0xf]
    %v340 = vld [vmem:[%s2 + $0x10] sm:$0xf]
    %v341 = vld [vmem:[%s2 + $0x14] sm:$0xf]
    %v342 = vld [vmem:[%s2 + $0x18] sm:$0xf]
    %v343 = vld [vmem:[%s2 + $0x1c] sm:$0xf]
    %v344 = vld [vmem:[%s2 + $0x20] sm:$0xf]
    %v345 = vld [vmem:[%s2 + $0x24] sm:$0xf]
    %v346 = vld [vmem:[%s2 + $0x28] sm:$0xf]
    %v347 = vld [vmem:[%s2 + $0x2c] sm:$0xf]
    %v348 = vld [vmem:[%s2 + $0x30] sm:$0xf]
    %v349 = vld [vmem:[%s2 + $0x34] sm:$0xf]
    %v350 = vld [vmem:[%s2 + $0x38] sm:$0xf]
    %v351 = vld [vmem:[%s2 + $0x3c] sm:$0xf]
    %v352 = vld [vmem:[%s4] sm:$0xff]
    %v353 = vld [vmem:[%s4 + $0x8] sm:$0xff]
    %v354 = vld [vmem:[%s4 + $0x10] sm:$0xff]
    %v355 = vld [vmem:[%s4 + $0x18] sm:$0xff]
    %v356 = vld [vmem:[%s4 + $0x20] sm:$0xff]
    %v357 = vld [vmem:[%s4 + $0x28] sm:$0xff]
    %v358 = vld [vmem:[%s4 + $0x30] sm:$0xff]
    %v359 = vld [vmem:[%s4 + $0x38] sm:$0xff]
    %v360 = vld [vmem:[%s4 + $0x40] sm:$0xff]
    %v361 = vld [vmem:[%s4 + $0x48] sm:$0xff]
    %v362 = vld [vmem:[%s4 + $0x50] sm:$0xff]
    %v363 = vld [vmem:[%s4 + $0x58] sm:$0xff]
    %v364 = vld [vmem:[%s4 + $0x60] sm:$0xff]
    %v365 = vld [vmem:[%s4 + $0x68] sm:$0xff]
    %v366 = vld [vmem:[%s4 + $0x70] sm:$0xff]
    %v367 = vld [vmem:[%s4 + $0x78] sm:$0xff]
    %369 = vset.pattern.permute.xlu0 0
    %370 = vperm.xlu0 %369, %v352
    %v371 = vpop.permute.xlu0 %370
    %374 = vset.pattern.permute.xlu0 0
    %375 = vperm.xlu0 %374, %v353
    %v376 = vpop.permute.xlu0 %375
    %379 = vset.pattern.permute.xlu0 0
    %380 = vperm.xlu0 %379, %v354
    %v381 = vpop.permute.xlu0 %380
    %384 = vset.pattern.permute.xlu0 0
    %385 = vperm.xlu0 %384, %v355
    %v386 = vpop.permute.xlu0 %385
    %389 = vset.pattern.permute.xlu0 0
    %390 = vperm.xlu0 %389, %v356
    %v391 = vpop.permute.xlu0 %390
    %394 = vset.pattern.permute.xlu0 0
    %395 = vperm.xlu0 %394, %v357
    %v396 = vpop.permute.xlu0 %395
    %399 = vset.pattern.permute.xlu0 0
    %400 = vperm.xlu0 %399, %v358
    %v401 = vpop.permute.xlu0 %400
    %404 = vset.pattern.permute.xlu0 0
    %405 = vperm.xlu0 %404, %v359
    %v406 = vpop.permute.xlu0 %405
    %409 = vset.pattern.permute.xlu0 0
    %410 = vperm.xlu0 %409, %v360
    %v411 = vpop.permute.xlu0 %410
    %414 = vset.pattern.permute.xlu0 0
    %415 = vperm.xlu0 %414, %v361
    %v416 = vpop.permute.xlu0 %415
    %419 = vset.pattern.permute.xlu0 0
    %420 = vperm.xlu0 %419, %v362
    %v421 = vpop.permute.xlu0 %420
    %424 = vset.pattern.permute.xlu0 0
    %425 = vperm.xlu0 %424, %v363
    %v426 = vpop.permute.xlu0 %425
    %429 = vset.pattern.permute.xlu0 0
    %430 = vperm.xlu0 %429, %v364
    %v431 = vpop.permute.xlu0 %430
    %434 = vset.pattern.permute.xlu0 0
    %435 = vperm.xlu0 %434, %v365
    %v436 = vpop.permute.xlu0 %435
    %439 = vset.pattern.permute.xlu0 0
    %440 = vperm.xlu0 %439, %v366
    %v441 = vpop.permute.xlu0 %440
    %444 = vset.pattern.permute.xlu0 0
    %445 = vperm.xlu0 %444, %v367
    %v446 = vpop.permute.xlu0 %445
    %v464 = vunpack.c.l.b16 %v336
    %v465 = vunpack.c.l.b16 %v337
    %v466 = vunpack.c.l.b16 %v338
    %v467 = vunpack.c.l.b16 %v339
    %v468 = vunpack.c.l.b16 %v340
    %v469 = vunpack.c.l.b16 %v341
    %v470 = vunpack.c.l.b16 %v342
    %v471 = vunpack.c.l.b16 %v343
    %v472 = vunpack.c.l.b16 %v344
    %v473 = vunpack.c.l.b16 %v345
    %v474 = vunpack.c.l.b16 %v346
    %v475 = vunpack.c.l.b16 %v347
    %v476 = vunpack.c.l.b16 %v348
    %v477 = vunpack.c.l.b16 %v349
    %v478 = vunpack.c.l.b16 %v350
    %v479 = vunpack.c.l.b16 %v351
    %v480 = vpack.c.b16 %v465, %v464
    %v481 = vpack.c.b16 %v467, %v466
    %v482 = vpack.c.b16 %v469, %v468
    %v483 = vpack.c.b16 %v471, %v470
    %v484 = vpack.c.b16 %v473, %v472
    %v485 = vpack.c.b16 %v475, %v474
    %v486 = vpack.c.b16 %v477, %v476
    %v487 = vpack.c.b16 %v479, %v478
    %v489 = vsel %vm214, %v480, 0
    %v492 = vsel %vm214, %v481, 0
    %v495 = vsel %vm214, %v482, 0
    %v498 = vsel %vm214, %v483, 0
    %v501 = vsel %vm214, %v484, 0
    %v504 = vsel %vm214, %v485, 0
    %v507 = vsel %vm214, %v486, 0
    %v510 = vsel %vm214, %v487, 0
    %512 = vmatprep.subr.bf16.mxu0 0
    %513 = vmatpush1.bf16.msra.mxu0 %v59
    %514 = vmatprep.subr.bf16.mxu0 0
    %515 = vmatpush1.bf16.msra.mxu0 %v60
    %516 = vmatprep.subr.bf16.mxu0 0
    %517 = vmatpush1.bf16.msra.mxu0 %v61
    %518 = vmatprep.subr.bf16.mxu0 0
    %519 = vmatpush1.bf16.msra.mxu0 0
    %520 = vmatprep.subr.bf16.mxu0 0
    %521 = vmatpush1.bf16.msra.mxu0 0
    %522 = vmatprep.subr.bf16.mxu0 0
    %523 = vmatpush1.bf16.msra.mxu0 0
    %524 = vmatprep.subr.bf16.mxu0 0
    %525 = vmatpush1.bf16.msra.mxu0 0
    %526 = vmatprep.subr.bf16.mxu0 0
    %527 = vmatpush1.bf16.msra.mxu0 0
    %528 = vmatprep.subr.bf16.mxu0 0
    %529 = vmatpush1.bf16.msra.mxu0 0
    %530 = vmatprep.subr.bf16.mxu0 0
    %531 = vmatpush1.bf16.msra.mxu0 0
    %532 = vmatprep.subr.bf16.mxu0 0
    %533 = vmatpush1.bf16.msra.mxu0 0
    %534 = vmatprep.subr.bf16.mxu0 0
    %535 = vmatpush1.bf16.msra.mxu0 0
    %536 = vmatprep.subr.bf16.mxu0 0
    %537 = vmatpush1.bf16.msra.mxu0 0
    %538 = vmatprep.subr.bf16.mxu0 0
    %539 = vmatpush1.bf16.msra.mxu0 0
    %540 = vmatprep.subr.bf16.mxu0 0
    %541 = vmatpush1.bf16.msra.mxu0 0
    %542 = vmatprep.subr.bf16.mxu0 0
    %543 = vmatpush1.bf16.msra.mxu0 0
    %544 = vmatprep.mubr.bf16.mxu0 0
    %545 = vmatmul.mubr.bf16.gmra.mrb[0].mxu0 %v489
    %v546 = vpop.f32.mrb[0].mxu0
    %v547 = vadd.f32 %v371, %v546
    %v548 = vpop.f32.mrb[0].mxu0
    %v549 = vpop.f32.mrb[0].mxu0
    %v550 = vadd.f32 %v376, %v549
    %v551 = vpop.f32.mrb[0].mxu0
    %552 = vmatprep.mubr.bf16.mxu0 0
    %553 = vmatmul.mubr.bf16.gmra.mrb[0].mxu0 %v492
    %v554 = vpop.f32.mrb[0].mxu0
    %v555 = vadd.f32 %v381, %v554
    %v556 = vpop.f32.mrb[0].mxu0
    %v557 = vpop.f32.mrb[0].mxu0
    %v558 = vadd.f32 %v386, %v557
    %v559 = vpop.f32.mrb[0].mxu0
    %560 = vmatprep.mubr.bf16.mxu0 0
    %561 = vmatmul.mubr.bf16.gmra.mrb[0].mxu0 %v495
    %v562 = vpop.f32.mrb[0].mxu0
    %v563 = vadd.f32 %v391, %v562
    %v564 = vpop.f32.mrb[0].mxu0
    %v565 = vpop.f32.mrb[0].mxu0
    %v566 = vadd.f32 %v396, %v565
    %v567 = vpop.f32.mrb[0].mxu0
    %568 = vmatprep.mubr.bf16.mxu0 0
    %569 = vmatmul.mubr.bf16.gmra.mrb[0].mxu0 %v498
    %v570 = vpop.f32.mrb[0].mxu0
    %v571 = vadd.f32 %v401, %v570
    %v572 = vpop.f32.mrb[0].mxu0
    %v573 = vpop.f32.mrb[0].mxu0
    %v574 = vadd.f32 %v406, %v573
    %v575 = vpop.f32.mrb[0].mxu0
    %576 = vmatprep.mubr.bf16.mxu0 0
    %577 = vmatmul.mubr.bf16.gmra.mrb[0].mxu0 %v501
    %v578 = vpop.f32.mrb[0].mxu0
    %v579 = vadd.f32 %v411, %v578
    %v580 = vpop.f32.mrb[0].mxu0
    %v581 = vpop.f32.mrb[0].mxu0
    %v582 = vadd.f32 %v416, %v581
    %v583 = vpop.f32.mrb[0].mxu0
    %584 = vmatprep.mubr.bf16.mxu0 0
    %585 = vmatmul.mubr.bf16.gmra.mrb[0].mxu0 %v504
    %v586 = vpop.f32.mrb[0].mxu0
    %v587 = vadd.f32 %v421, %v586
    %v588 = vpop.f32.mrb[0].mxu0
    %v589 = vpop.f32.mrb[0].mxu0
    %v590 = vadd.f32 %v426, %v589
    %v591 = vpop.f32.mrb[0].mxu0
    %592 = vmatprep.mubr.bf16.mxu0 0
    %593 = vmatmul.mubr.bf16.gmra.mrb[0].mxu0 %v507
    %v594 = vpop.f32.mrb[0].mxu0
    %v595 = vadd.f32 %v431, %v594
    %v596 = vpop.f32.mrb[0].mxu0
    %v597 = vpop.f32.mrb[0].mxu0
    %v598 = vadd.f32 %v436, %v597
    %v599 = vpop.f32.mrb[0].mxu0
    %600 = vmatprep.mubr.bf16.mxu0 0
    %601 = vmatmul.mubr.bf16.gmra.mrb[0].mxu0 %v510
    %v602 = vpop.f32.mrb[0].mxu0
    %v603 = vadd.f32 %v441, %v602
    %v604 = vpop.f32.mrb[0].mxu0
    %v605 = vpop.f32.mrb[0].mxu0
    %v606 = vadd.f32 %v446, %v605
    %v607 = vpop.f32.mrb[0].mxu0
    %608 = vdwg.mxu0
    %v609 = vmul.f32 %v547, 0.5
    %v610 = vmul.f32 %v550, 0.5
    %v611 = vmul.f32 %v555, 0.5
    %v612 = vmul.f32 %v558, 0.5
    %v613 = vmul.f32 %v563, 0.5
    %v614 = vmul.f32 %v566, 0.5
    %v615 = vmul.f32 %v571, 0.5
    %v616 = vmul.f32 %v574, 0.5
    %v617 = vmul.f32 %v579, 0.5
    %v618 = vmul.f32 %v582, 0.5
    %v619 = vmul.f32 %v587, 0.5
    %v620 = vmul.f32 %v590, 0.5
    %v621 = vmul.f32 %v595, 0.5
    %v622 = vmul.f32 %v598, 0.5
    %v623 = vmul.f32 %v603, 0.5
    %v624 = vmul.f32 %v606, 0.5
    %v625 = vmul.f32 %v547, 0.70710677
    %v626 = vmul.f32 %v550, 0.70710677
    %v627 = vmul.f32 %v555, 0.70710677
    %v628 = vmul.f32 %v558, 0.70710677
    %v629 = vmul.f32 %v563, 0.70710677
    %v630 = vmul.f32 %v566, 0.70710677
    %v631 = vmul.f32 %v571, 0.70710677
    %v632 = vmul.f32 %v574, 0.70710677
    %v633 = vmul.f32 %v579, 0.70710677
    %v634 = vmul.f32 %v582, 0.70710677
    %v635 = vmul.f32 %v587, 0.70710677
    %v636 = vmul.f32 %v590, 0.70710677
    %v637 = vmul.f32 %v595, 0.70710677
    %v638 = vmul.f32 %v598, 0.70710677
    %v639 = vmul.f32 %v603, 0.70710677
    %v640 = vmul.f32 %v606, 0.70710677
    %v641 = verf.f32.pop %v625
    %v642 = verf.f32.pop %v626
    %v643 = verf.f32.pop %v627
    %v644 = verf.f32.pop %v628
    %v645 = verf.f32.pop %v629
    %v646 = verf.f32.pop %v630
    %v647 = verf.f32.pop %v631
    %v648 = verf.f32.pop %v632
    %v649 = verf.f32.pop %v633
    %v650 = verf.f32.pop %v634
    %v651 = verf.f32.pop %v635
    %v652 = verf.f32.pop %v636
    %v653 = verf.f32.pop %v637
    %v654 = verf.f32.pop %v638
    %v655 = verf.f32.pop %v639
    %v656 = verf.f32.pop %v640
    %v657 = vadd.f32 %v641, 1.0
    %v658 = vadd.f32 %v642, 1.0
    %v659 = vadd.f32 %v643, 1.0
    %v660 = vadd.f32 %v644, 1.0
    %v661 = vadd.f32 %v645, 1.0
    %v662 = vadd.f32 %v646, 1.0
    %v663 = vadd.f32 %v647, 1.0
    %v664 = vadd.f32 %v648, 1.0
    %v665 = vadd.f32 %v649, 1.0
    %v666 = vadd.f32 %v650, 1.0
    %v667 = vadd.f32 %v651, 1.0
    %v668 = vadd.f32 %v652, 1.0
    %v669 = vadd.f32 %v653, 1.0
    %v670 = vadd.f32 %v654, 1.0
    %v671 = vadd.f32 %v655, 1.0
    %v672 = vadd.f32 %v656, 1.0
    %v673 = vmul.f32 %v609, %v657
    %v674 = vmul.f32 %v610, %v658
    %v675 = vmul.f32 %v611, %v659
    %v676 = vmul.f32 %v612, %v660
    %v677 = vmul.f32 %v613, %v661
    %v678 = vmul.f32 %v614, %v662
    %v679 = vmul.f32 %v615, %v663
    %v680 = vmul.f32 %v616, %v664
    %v681 = vmul.f32 %v617, %v665
    %v682 = vmul.f32 %v618, %v666
    %v683 = vmul.f32 %v619, %v667
    %v684 = vmul.f32 %v620, %v668
    %v685 = vmul.f32 %v621, %v669
    %v686 = vmul.f32 %v622, %v670
    %v687 = vmul.f32 %v623, %v671
    %v688 = vmul.f32 %v624, %v672
    %v689 = vmul.f32 %v673, %v274
    %v690 = vmul.f32 %v674, %v277
    %v691 = vmul.f32 %v675, %v282
    %v692 = vmul.f32 %v676, %v285
    %v693 = vmul.f32 %v677, %v290
    %v694 = vmul.f32 %v678, %v293
    %v695 = vmul.f32 %v679, %v298
    %v696 = vmul.f32 %v680, %v301
    %v697 = vmul.f32 %v681, %v306
    %v698 = vmul.f32 %v682, %v309
    %v699 = vmul.f32 %v683, %v314
    %v700 = vmul.f32 %v684, %v317
    %v701 = vmul.f32 %v685, %v322
    %v702 = vmul.f32 %v686, %v325
    %v703 = vmul.f32 %v687, %v330
    %v704 = vmul.f32 %v688, %v333
    %v705 = vpack.c.bf16 %v690, %v689
    %v706 = vpack.c.bf16 %v692, %v691
    %v707 = vpack.c.bf16 %v694, %v693
    %v708 = vpack.c.bf16 %v696, %v695
    %v709 = vpack.c.bf16 %v698, %v697
    %v710 = vpack.c.bf16 %v700, %v699
    %v711 = vpack.c.bf16 %v702, %v701
    %v712 = vpack.c.bf16 %v704, %v703
    %v713 = vld [vmem:[%s5] sm:$0xf]
    %v714 = vld [vmem:[%s5 + $0x4] sm:$0xf]
    %v715 = vld [vmem:[%s5 + $0x8] sm:$0xf]
    %v716 = vld [vmem:[%s5 + $0xc] sm:$0xf]
    %v717 = vld [vmem:[%s5 + $0x10] sm:$0xf]
    %v718 = vld [vmem:[%s5 + $0x14] sm:$0xf]
    %v719 = vld [vmem:[%s6] sm:$0xff]
    %v720 = vld [vmem:[%s6 + $0x8] sm:$0xff]
    %v721 = vld [vmem:[%s6 + $0x10] sm:$0xff]
    %v722 = vld [vmem:[%s6 + $0x18] sm:$0xff]
    %v723 = vld [vmem:[%s6 + $0x20] sm:$0xff]
    %v724 = vld [vmem:[%s6 + $0x28] sm:$0xff]
    %726 = vset.pattern.permute.xlu0 0
    %727 = vperm.xlu0 %726, %v719
    %v728 = vpop.permute.xlu0 %727
    %731 = vset.pattern.permute.xlu0 0
    %732 = vperm.xlu0 %731, %v720
    %v733 = vpop.permute.xlu0 %732
    %736 = vset.pattern.permute.xlu0 0
    %737 = vperm.xlu0 %736, %v721
    %v738 = vpop.permute.xlu0 %737
    %741 = vset.pattern.permute.xlu0 0
    %742 = vperm.xlu0 %741, %v722
    %v743 = vpop.permute.xlu0 %742
    %746 = vset.pattern.permute.xlu0 0
    %747 = vperm.xlu0 %746, %v723
    %v748 = vpop.permute.xlu0 %747
    %751 = vset.pattern.permute.xlu0 0
    %752 = vperm.xlu0 %751, %v724
    %v753 = vpop.permute.xlu0 %752
    %v761 = vunpack.c.l.b16 %v713
    %v762 = vunpack.c.l.b16 %v714
    %v763 = vunpack.c.l.b16 %v715
    %v764 = vunpack.c.l.b16 %v716
    %v765 = vunpack.c.l.b16 %v717
    %v766 = vunpack.c.l.b16 %v718
    %v767 = vpack.c.b16 %v762, %v761
    %v768 = vpack.c.b16 %v764, %v763
    %v769 = vpack.c.b16 %v766, %v765
    %773 = vmatprep.subr.bf16.mxu0 0
    %774 = vmatpush1.bf16.msra.mxu0 %v705
    %775 = vmatprep.subr.bf16.mxu0 0
    %776 = vmatpush1.bf16.msra.mxu0 %v706
    %777 = vmatprep.subr.bf16.mxu0 0
    %778 = vmatpush1.bf16.msra.mxu0 %v707
    %779 = vmatprep.subr.bf16.mxu0 0
    %780 = vmatpush1.bf16.msra.mxu0 %v708
    %781 = vmatprep.subr.bf16.mxu0 0
    %782 = vmatpush1.bf16.msra.mxu0 %v709
    %783 = vmatprep.subr.bf16.mxu0 0
    %784 = vmatpush1.bf16.msra.mxu0 %v710
    %785 = vmatprep.subr.bf16.mxu0 0
    %786 = vmatpush1.bf16.msra.mxu0 %v711
    %787 = vmatprep.subr.bf16.mxu0 0
    %788 = vmatpush1.bf16.msra.mxu0 %v712
    %789 = vmatprep.subr.bf16.mxu0 0
    %790 = vmatpush1.bf16.msra.mxu0 0
    %791 = vmatprep.subr.bf16.mxu0 0
    %792 = vmatpush1.bf16.msra.mxu0 0
    %793 = vmatprep.subr.bf16.mxu0 0
    %794 = vmatpush1.bf16.msra.mxu0 0
    %795 = vmatprep.subr.bf16.mxu0 0
    %796 = vmatpush1.bf16.msra.mxu0 0
    %797 = vmatprep.subr.bf16.mxu0 0
    %798 = vmatpush1.bf16.msra.mxu0 0
    %799 = vmatprep.subr.bf16.mxu0 0
    %800 = vmatpush1.bf16.msra.mxu0 0
    %801 = vmatprep.subr.bf16.mxu0 0
    %802 = vmatpush1.bf16.msra.mxu0 0
    %803 = vmatprep.subr.bf16.mxu0 0
    %804 = vmatpush1.bf16.msra.mxu0 0
    %805 = vmatprep.mubr.bf16.mxu0 0
    %806 = vmatmul.mubr.bf16.gmra.mrb[0].mxu0 %v767
    %v807 = vpop.f32.mrb[0].mxu0
    %v808 = vadd.f32 %v728, %v807
    %v809 = vpop.f32.mrb[0].mxu0
    %v810 = vpop.f32.mrb[0].mxu0
    %v811 = vadd.f32 %v733, %v810
    %v812 = vpop.f32.mrb[0].mxu0
    %813 = vmatprep.mubr.bf16.mxu0 0
    %814 = vmatmul.mubr.bf16.gmra.mrb[0].mxu0 %v768
    %v815 = vpop.f32.mrb[0].mxu0
    %v816 = vadd.f32 %v738, %v815
    %v817 = vpop.f32.mrb[0].mxu0
    %v818 = vpop.f32.mrb[0].mxu0
    %v819 = vadd.f32 %v743, %v818
    %v820 = vpop.f32.mrb[0].mxu0
    %821 = vmatprep.mubr.bf16.mxu0 0
    %822 = vmatmul.mubr.bf16.gmra.mrb[0].mxu0 %v769
    %v823 = vpop.f32.mrb[0].mxu0
    %v824 = vadd.f32 %v748, %v823
    %v825 = vpop.f32.mrb[0].mxu0
    %v826 = vpop.f32.mrb[0].mxu0
    %v827 = vadd.f32 %v753, %v826
    %v828 = vpop.f32.mrb[0].mxu0
    %829 = vdwg.mxu0
    %830 = vst [vmem:[#allocation2] sm:$0xff] %v808
    %831 = vst [vmem:[#allocation2 + $0x8] sm:$0xff] %v811
    %832 = vst [vmem:[#allocation2 + $0x10] sm:$0xff] %v816
    %833 = vst [vmem:[#allocation2 + $0x18] sm:$0xff] %v819
    %834 = vst [vmem:[#allocation2 + $0x20] sm:$0xff] %v824
    %835 = vst [vmem:[#allocation2 + $0x28] sm:$0xff] %v827
    // Predicated region
    $region30: #{tpu_custom_call.1} parent=1 // pred_check
      _
    $region31: #{tpu_custom_call.1} parent=1 // pred_check_branch
      %837 = sbr.rel (0) target = $region33
    $region32: #{tpu_custom_call.1} parent=1 // pred_region
      %s839 = ssub.s32 768, 768
      %840 = vsyncadd [#allocation3], %s839
      %s841 = sshll.u32 [#allocation2], 4
      %s842 = int_to_ptr.vmem [resolvable:$true] %s841
      %847 = dma.vmem_to_hbm [thread:$0]  %s842, 768, %s7, [#allocation3], 128, 128, 8
    $region33: #{tpu_custom_call.1} parent=1 // pred_fallthru
      _
    // Predicated region
    $region34: #{tpu_custom_call.1} parent=1 // pred_check
      _
    $region35: #{tpu_custom_call.1} parent=1 // pred_check_branch
      %849 = sbr.rel (0) target = $region37
    $region36: #{tpu_custom_call.1} parent=1 // pred_region
      %850 = dma.done [#allocation3], 768
    $region37: #{tpu_custom_call.1} parent=1 // pred_fallthru
      _
    %851 = vsyncpa [#allocation3], 1

</llo_original>
